<compile_context>
chip_gen: v7x
topology: tpu7x:2x2x1
jax: 0.10.0
libtpu: 0.0.40
codegen_flags: <defaults>
</compile_context>

<pallas_src>
import functools

import jax
import jax.numpy as jnp
from jax.experimental import pallas as pl
from jax.experimental.pallas import tpu as pltpu


# ----------------------------------------------------------------------------
# Kernel: one (rows_tile, K) @ (K, 2g) matmul + bias, then the pairwise
# 2-class softmax expressed as an elementwise sigmoid of the logit difference.
# d[:, 2j+c] = z_other - z_c for (packed) row j, class c  =>  out = 1/(1+e^d).
# ----------------------------------------------------------------------------
def _pair_softmax_kernel(x_ref, wd_ref, bd_ref, out_ref):
    d = jnp.dot(x_ref[...], wd_ref[...],
                preferred_element_type=jnp.float32) + bd_ref[...]
    out_ref[...] = (1.0 / (1.0 + jnp.exp(d))).astype(out_ref.dtype)


# ----------------------------------------------------------------------------
# Parameter fusion (done ONCE, outside the jitted forward).
# ----------------------------------------------------------------------------
def fuse_params(params):
    """Collapse the 5 linear layers into a single affine map (f32, exact up to
    FP rounding -- there are no nonlinearities in the chain)."""
    w_eff = params["w1"].astype(jnp.float32)
    b_eff = params["b1"].astype(jnp.float32)
    for i in range(2, 6):
        w = params[f"w{i}"].astype(jnp.float32)
        b = params[f"b{i}"].astype(jnp.float32)
        w_eff = w_eff @ w
        b_eff = b_eff @ w + b
    return w_eff, b_eff  # (F, 2), (1, 2)


# ----------------------------------------------------------------------------
# Tiling helpers.
# ----------------------------------------------------------------------------
def _vmem_capacity_bytes():
    try:
        cap = int(getattr(pltpu.get_tpu_info(), "vmem_capacity_bytes"))
        if cap > 0:
            return cap
    except Exception:
        pass
    return 64 * 1024 * 1024  # conservative fallback (v7x per-core physical)


def _choose_pack_factor(batch, feat):
    """Pick g so that the packed row (g*feat) is lane-aligned (multiple of
    128) and the reshape (B,F)->(B/g, g*F) is a free row-major bitcast
    (batch % g == 0). Prefer g=64 (=> 2g=128 fully lane-dense output)."""
    if feat >= 128:
        return 1
    for g in (64, 32, 16, 8, 4, 2):
        if (g * feat) % 128 == 0 and batch % g == 0:
            return g
    return 1


def _tile_plan(rows, cols, ncls, x_itemsize, override):
    """Choose the batch-row tile and a need-based VMEM limit."""
    cap = _vmem_capacity_bytes()
    if override is not None:
        tb = int(override)
    else:
        budget = (cap * 3) // 4                       # generation-aware budget
        resident = cols * ncls * x_itemsize + ncls * 4  # W_diff + b_diff
        per_row = 2 * (cols * x_itemsize + ncls * 4)    # dbl-buffered x + out
        tb = (budget - resident) // max(per_row, 1)
        # Cap each x tile at 32 MiB: fully amortizes the ~0.35us/step grid
        # overhead while keeping >=2 pipeline stages in flight.
        tb = min(tb, (32 << 20) // max(cols * x_itemsize, 1))
    tb = max(int(tb), 8)
    if tb >= rows:
        tb = rows                       # block == full dim is always legal
    else:
        tb = (tb // 8) * 8              # sublane alignment

    need = (2 * tb * cols * x_itemsize      # double-buffered x tiles
            + 2 * tb * ncls * 4             # double-buffered out tiles
            + cols * ncls * x_itemsize      # resident W_diff
            + ncls * 4)                     # resident b_diff
    limit = max(2 * need, need + (8 << 20))   # need-based + headroom
    limit = min(limit, cap - (8 << 20))
    limit = max(limit, need + (2 << 20))
    return tb, int(limit)


# ----------------------------------------------------------------------------
# Forward pass.
# ----------------------------------------------------------------------------
@functools.partial(jax.jit, static_argnames=("block_rows",))
def fake_news_classifier_forward(x, w_eff, b_eff, block_rows=None):
    """x: (B, F) f32 or bf16 (consumed as stored -- no wrapper cast/pad pass);
    w_eff (F, 2), b_eff (1, 2) f32 from fuse_params()."""
    batch, feat = x.shape

    # Logit-difference weights: d_c = z_other - z_c  =>  softmax_c = sigmoid(-d_c)
    w_d = w_eff[:, ::-1] - w_eff          # (F, 2) f32
    b_d = b_eff[:, ::-1] - b_eff          # (1, 2) f32

    g = _choose_pack_factor(batch, feat)
    if g > 1:
        x_p = x.reshape(batch // g, g * feat)                     # free reshape
        w_p = jnp.kron(jnp.eye(g, dtype=w_d.dtype), w_d)          # (g*F, 2g)
        b_p = jnp.tile(b_d, (1, g))                               # (1, 2g)
    else:
        x_p, w_p, b_p = x, w_d, b_d

    rows, cols = x_p.shape
    ncls = 2 * g
    w_p = w_p.astype(x.dtype)             # matmul in x's dtype, f32 accumulate
    b_p = b_p.astype(jnp.float32)

    x_itemsize = jnp.dtype(x.dtype).itemsize
    tb, vmem_limit = _tile_plan(rows, cols, ncls, x_itemsize, block_rows)
    grid = (pl.cdiv(rows, tb),)           # non-divisible tail is masked by Pallas

    # TODO(synk): if in_features ever grows so large that a (tb, g*F) tile plus
    # W_diff exceeds VMEM, add a K-reduction grid axis with a (tb, 2g) f32
    # accumulator (pl.when init/finalize) instead of shrinking tb.
    # TODO(synk): on v7x, verify via xprof that the batch axis shards across
    # both TensorCores; if not, switch to pltpu.CORE_PARALLEL / pl.core_map.
    # TODO(synk): if exposed DMA remains at step boundaries after large tiles,
    # try pipeline_mode=pl.Buffered(3) on the x BlockSpec (VMEM permitting).
    out = pl.pallas_call(
        _pair_softmax_kernel,
        out_shape=jax.ShapeDtypeStruct((rows, ncls), jnp.float32),
        grid=grid,
        in_specs=[
            pl.BlockSpec((tb, cols), lambda i: (i, 0)),    # x tile, pipelined
            pl.BlockSpec((cols, ncls), lambda i: (0, 0)),  # W_diff, resident
            pl.BlockSpec((1, ncls), lambda i: (0, 0)),     # b_diff, resident
        ],
        out_specs=pl.BlockSpec((tb, ncls), lambda i: (i, 0)),
        compiler_params=pltpu.CompilerParams(
            dimension_semantics=("parallel",),
            vmem_limit_bytes=vmem_limit,
        ),
    )(x_p, w_p, b_p)

    return out.reshape(batch, 2)          # free row-major reshape


# ----------------------------------------------------------------------------
# Parameter init (matches PyTorch nn.Linear default U(-1/sqrt(fan_in), ...)),
# and a pure-JAX reference of the original 5-layer chain + softmax.
# ----------------------------------------------------------------------------
def init_params(key, in_features):
    dims = [in_features, 128, 64, 32, 16, 2]
    params = {}
    for i in range(5):
        fan_in, fan_out = dims[i], dims[i + 1]
        key, kw, kb = jax.random.split(key, 3)
        bound = 1.0 / jnp.sqrt(jnp.float32(fan_in))
        # Stored as (in, out): transpose of PyTorch's (out, in) weight.
        params[f"w{i + 1}"] = jax.random.uniform(
            kw, (fan_in, fan_out), jnp.float32, minval=-bound, maxval=bound)
        params[f"b{i + 1}"] = jax.random.uniform(
            kb, (1, fan_out), jnp.float32, minval=-bound, maxval=bound)
    return params


def reference_forward(x, params):
    h = x
    for i in range(1, 6):
        h = h @ params[f"w{i}"] + params[f"b{i}"]
    return jax.nn.softmax(h, axis=-1)


if __name__ == "__main__":
    key = jax.random.PRNGKey(0)
    in_features = 32
    kp, kx1, kx2, kx3 = jax.random.split(key, 4)

    params = init_params(kp, in_features)
    w_eff, b_eff = fuse_params(params)     # fused ONCE, outside the jitted call

    def check(x, block_rows=None, tol=2e-3):
        out = jax.block_until_ready(
            fake_news_classifier_forward(x, w_eff, b_eff,
                                         block_rows=block_rows))
        ref = reference_forward(x.astype(jnp.float32), params)
        assert out.shape == (x.shape[0], 2), out.shape
        assert bool(jnp.all(jnp.isfinite(out))), "non-finite output"
        assert jnp.allclose(out, ref, atol=tol, rtol=tol), "mismatch vs reference"
        assert jnp.allclose(jnp.sum(out, axis=-1), 1.0, atol=5e-3), "rows != 1"

    # 1) Small spec-like batch: packed path (g=16), single grid step.
    x1 = jax.random.normal(kx1, (16, in_features), jnp.float32)
    check(x1)

    # 2) Larger batch: fully lane-dense packed path (g=64 -> 128 output lanes),
    #    block_rows=8 forces a 2-step grid so the software pipeline is exercised.
    x2 = jax.random.normal(kx2, (1024, in_features), jnp.float32)
    check(x2, block_rows=8)

    # 3) Non-packable batch (10 rows): unpacked fallback with a masked tail block.
    x3 = jax.random.normal(kx3, (10, in_features), jnp.float32)
    check(x3, block_rows=8)

    # 4) bf16 storage path: x already lives in bf16, no wrapper-side cast pass.
    check(x1.astype(jnp.bfloat16), tol=3e-2)

    print("KERNEL_OK")
</pallas_src>

<mosaic_0001>
module attributes {stable_mosaic.version = 11 : i64} {
  func.func @_pair_softmax_kernel(%arg0: i32, %arg1: memref<1x512xf32, #tpu.memory_space<vmem>>, %arg2: memref<512x32xf32, #tpu.memory_space<vmem>>, %arg3: memref<1x32xf32, #tpu.memory_space<vmem>>, %arg4: memref<1x32xf32, #tpu.memory_space<vmem>>) attributes {dimension_semantics = [#tpu.dimension_semantics<parallel>], iteration_bounds = array<i64: 1>, scalar_prefetch = 0 : i64, scratch_operands = 0 : i64, tpu.core_type = #tpu.core_type<tc>, window_params = [{transform_indices = @transform_0, window_bounds = array<i64: 1, 512>}, {pipeline_mode = #tpu.pipeline_mode<synchronous>, transform_indices = @transform_1, window_bounds = array<i64: 512, 32>}, {pipeline_mode = #tpu.pipeline_mode<synchronous>, transform_indices = @transform_2, window_bounds = array<i64: 1, 32>}, {transform_indices = @transform_3, window_bounds = array<i64: 1, 32>}]} {
    %c0 = arith.constant 0 : index
    %c0_0 = arith.constant 0 : index
    %0 = vector.load %arg1[%c0, %c0_0] : memref<1x512xf32, #tpu.memory_space<vmem>>, vector<1x512xf32>
    %c0_1 = arith.constant 0 : index
    %c0_2 = arith.constant 0 : index
    %1 = vector.load %arg2[%c0_1, %c0_2] : memref<512x32xf32, #tpu.memory_space<vmem>>, vector<512x32xf32>
    %cst = arith.constant dense<0.000000e+00> : vector<1x32xf32>
    %2 = tpu.matmul %0, %1, %cst {dimension_numbers = #tpu.dot_dimension_numbers<[1], [0], [0], [1], [0, 0, 1, 1], [], []>} : vector<1x512xf32>, vector<512x32xf32>, vector<1x32xf32> -> vector<1x32xf32>
    %c0_3 = arith.constant 0 : index
    %c0_4 = arith.constant 0 : index
    %3 = vector.load %arg3[%c0_3, %c0_4] : memref<1x32xf32, #tpu.memory_space<vmem>>, vector<1x32xf32>
    %4 = arith.addf %2, %3 : vector<1x32xf32>
    %5 = math.exp %4 : vector<1x32xf32>
    %cst_5 = arith.constant 1.000000e+00 : f32
    %6 = vector.broadcast %cst_5 : f32 to vector<1x32xf32>
    %7 = arith.addf %6, %5 : vector<1x32xf32>
    %cst_6 = arith.constant 1.000000e+00 : f32
    %8 = vector.broadcast %cst_6 : f32 to vector<1x32xf32>
    %9 = arith.divf %8, %7 : vector<1x32xf32>
    %c0_7 = arith.constant 0 : index
    %c0_8 = arith.constant 0 : index
    %10 = vector.load %arg4[%c0_7, %c0_8] : memref<1x32xf32, #tpu.memory_space<vmem>>, vector<1x32xf32>
    tpu.vector_store %arg4[%c0_7, %c0_8], %9 {strides = array<i32>} : memref<1x32xf32, #tpu.memory_space<vmem>>, vector<1x32xf32>,
    return
  }
  func.func @transform_0(%arg0: i32) -> (i32, i32) {
    %c0_i32 = arith.constant 0 : i32
    %c0_i32_0 = arith.constant 0 : i32
    return %arg0, %c0_i32 : i32, i32
  }
  func.func @transform_1(%arg0: i32) -> (i32, i32) {
    %c0_i32 = arith.constant 0 : i32
    %c0_i32_0 = arith.constant 0 : i32
    %c0_i32_1 = arith.constant 0 : i32
    return %c0_i32, %c0_i32_0 : i32, i32
  }
  func.func @transform_2(%arg0: i32) -> (i32, i32) {
    %c0_i32 = arith.constant 0 : i32
    %c0_i32_0 = arith.constant 0 : i32
    %c0_i32_1 = arith.constant 0 : i32
    return %c0_i32, %c0_i32_0 : i32, i32
  }
  func.func @transform_3(%arg0: i32) -> (i32, i32) {
    %c0_i32 = arith.constant 0 : i32
    %c0_i32_0 = arith.constant 0 : i32
    return %arg0, %c0_i32 : i32, i32
  }
}

</mosaic_0001>

<llo_original>
// kernel: sub.2
$region0: #{sub.2}
  #allocation0 [shape = 's32[1]{0}', space=sflag, size = 0x4, scoped, tag = 'scoped memory for sub.2']
  %s0 = inlined_call_operand.vmem [shape: f32[32,2], index: 0, kind: input, shape index: {}]
  %s1 = inlined_call_operand.vmem [shape: f32[32,2], index: 1, kind: input, shape index: {}]
  %s2 = inlined_call_operand.vmem [shape: f32[32,2], index: 2, kind: output, shape index: {}]
  %v3 = vld [vmem:[%s0] sm:$0x3]
  %v4 = vld [vmem:[%s1] sm:$0x3]
  %5 = xla_tuple %v3, %v4
  %6 = xla_tuple %5
  %v7 = vsub.f32 %v3, %v4
  %8 = xla_tuple %v7
  %9 = vst [vmem:[%s2] sm:$0x3] %v7

// kernel: fake_news_classifier_forward.1
$region0: #{fake_news_classifier_forward.1}
  #allocation0 [shape = 'u32[]', space=smem, size = 0x4, offset = 0x4, fixed_abs, tag = 'smem constant byte address 0x4 - core index']
  #allocation1 [shape = 'u32[144,128]{1,0:T(1,128)}', space=vmem, size = 0x12000, scoped, tag = 'internal scratch']
  %s0 = inlined_call_operand.vmem [shape: f32[1,512], index: 0, kind: input, shape index: {}]
  %s1 = inlined_call_operand.vmem [shape: f32[512,32], index: 1, kind: input, shape index: {}]
  %s2 = inlined_call_operand.vmem [shape: f32[1,32], index: 2, kind: input, shape index: {}]
  %s3 = inlined_call_operand.vmem [shape: f32[1,32], index: 3, kind: output, shape index: {}]
  %s4 = sld [smem:[#allocation0]]
  $region22: #{fake_news_classifier_forward.1} parent=0
    _
  %s6 = ssub.s32 1, %s4
  %s7 = scalar_select 0, %s6, %s4
  // Predicated region
  $region2: #{fake_news_classifier_forward.1} parent=0 // pred_check
    _
  $region3: #{fake_news_classifier_forward.1} parent=0 // pred_check_branch
    %9 = sbr.rel (0) target = $region5
  $region4: #{fake_news_classifier_forward.1} parent=0 // pred_region
    _
  $region5: #{fake_news_classifier_forward.1} parent=0 // pred_fallthru
    _
  // Predicated region
  $region6: #{fake_news_classifier_forward.1} parent=0 // pred_check
    _
  $region7: #{fake_news_classifier_forward.1} parent=0 // pred_check_branch
    %11 = sbr.rel (0) target = $region9
  $region8: #{fake_news_classifier_forward.1} parent=0 // pred_region
    _
  $region9: #{fake_news_classifier_forward.1} parent=0 // pred_fallthru
    _
  // Predicated region
  $region10: #{fake_news_classifier_forward.1} parent=0 // pred_check
    _
  $region11: #{fake_news_classifier_forward.1} parent=0 // pred_check_branch
    %13 = sbr.rel (0) target = $region13
  $region12: #{fake_news_classifier_forward.1} parent=0 // pred_region
    _
  $region13: #{fake_news_classifier_forward.1} parent=0 // pred_fallthru
    _
  %v14 = vld [vmem:[%s0] sm:$0xf]
  %v15 = vld [vmem:[%s1] sm:$0xff]
  %v16 = vld [vmem:[%s1 + $0x8] sm:$0xff]
  %v17 = vld [vmem:[%s1 + $0x10] sm:$0xff]
  %v18 = vld [vmem:[%s1 + $0x18] sm:$0xff]
  %v19 = vld [vmem:[%s1 + $0x20] sm:$0xff]
  %v20 = vld [vmem:[%s1 + $0x28] sm:$0xff]
  %v21 = vld [vmem:[%s1 + $0x30] sm:$0xff]
  %v22 = vld [vmem:[%s1 + $0x38] sm:$0xff]
  %v23 = vld [vmem:[%s1 + $0x40] sm:$0xff]
  %v24 = vld [vmem:[%s1 + $0x48] sm:$0xff]
  %v25 = vld [vmem:[%s1 + $0x50] sm:$0xff]
  %v26 = vld [vmem:[%s1 + $0x58] sm:$0xff]
  %v27 = vld [vmem:[%s1 + $0x60] sm:$0xff]
  %v28 = vld [vmem:[%s1 + $0x68] sm:$0xff]
  %v29 = vld [vmem:[%s1 + $0x70] sm:$0xff]
  %v30 = vld [vmem:[%s1 + $0x78] sm:$0xff]
  %v31 = vld [vmem:[%s1 + $0x80] sm:$0xff]
  %v32 = vld [vmem:[%s1 + $0x88] sm:$0xff]
  %v33 = vld [vmem:[%s1 + $0x90] sm:$0xff]
  %v34 = vld [vmem:[%s1 + $0x98] sm:$0xff]
  %v35 = vld [vmem:[%s1 + $0xa0] sm:$0xff]
  %v36 = vld [vmem:[%s1 + $0xa8] sm:$0xff]
  %v37 = vld [vmem:[%s1 + $0xb0] sm:$0xff]
  %v38 = vld [vmem:[%s1 + $0xb8] sm:$0xff]
  %v39 = vld [vmem:[%s1 + $0xc0] sm:$0xff]
  %v40 = vld [vmem:[%s1 + $0xc8] sm:$0xff]
  %v41 = vld [vmem:[%s1 + $0xd0] sm:$0xff]
  %v42 = vld [vmem:[%s1 + $0xd8] sm:$0xff]
  %v43 = vld [vmem:[%s1 + $0xe0] sm:$0xff]
  %v44 = vld [vmem:[%s1 + $0xe8] sm:$0xff]
  %v45 = vld [vmem:[%s1 + $0xf0] sm:$0xff]
  %v46 = vld [vmem:[%s1 + $0xf8] sm:$0xff]
  %v47 = vld [vmem:[%s1 + $0x100] sm:$0xff]
  %v48 = vld [vmem:[%s1 + $0x108] sm:$0xff]
  %v49 = vld [vmem:[%s1 + $0x110] sm:$0xff]
  %v50 = vld [vmem:[%s1 + $0x118] sm:$0xff]
  %v51 = vld [vmem:[%s1 + $0x120] sm:$0xff]
  %v52 = vld [vmem:[%s1 + $0x128] sm:$0xff]
  %v53 = vld [vmem:[%s1 + $0x130] sm:$0xff]
  %v54 = vld [vmem:[%s1 + $0x138] sm:$0xff]
  %v55 = vld [vmem:[%s1 + $0x140] sm:$0xff]
  %v56 = vld [vmem:[%s1 + $0x148] sm:$0xff]
  %v57 = vld [vmem:[%s1 + $0x150] sm:$0xff]
  %v58 = vld [vmem:[%s1 + $0x158] sm:$0xff]
  %v59 = vld [vmem:[%s1 + $0x160] sm:$0xff]
  %v60 = vld [vmem:[%s1 + $0x168] sm:$0xff]
  %v61 = vld [vmem:[%s1 + $0x170] sm:$0xff]
  %v62 = vld [vmem:[%s1 + $0x178] sm:$0xff]
  %v63 = vld [vmem:[%s1 + $0x180] sm:$0xff]
  %v64 = vld [vmem:[%s1 + $0x188] sm:$0xff]
  %v65 = vld [vmem:[%s1 + $0x190] sm:$0xff]
  %v66 = vld [vmem:[%s1 + $0x198] sm:$0xff]
  %v67 = vld [vmem:[%s1 + $0x1a0] sm:$0xff]
  %v68 = vld [vmem:[%s1 + $0x1a8] sm:$0xff]
  %v69 = vld [vmem:[%s1 + $0x1b0] sm:$0xff]
  %v70 = vld [vmem:[%s1 + $0x1b8] sm:$0xff]
  %v71 = vld [vmem:[%s1 + $0x1c0] sm:$0xff]
  %v72 = vld [vmem:[%s1 + $0x1c8] sm:$0xff]
  %v73 = vld [vmem:[%s1 + $0x1d0] sm:$0xff]
  %v74 = vld [vmem:[%s1 + $0x1d8] sm:$0xff]
  %v75 = vld [vmem:[%s1 + $0x1e0] sm:$0xff]
  %v76 = vld [vmem:[%s1 + $0x1e8] sm:$0xff]
  %v77 = vld [vmem:[%s1 + $0x1f0] sm:$0xff]
  %v78 = vld [vmem:[%s1 + $0x1f8] sm:$0xff]
  %v79 = vld [vmem:[%s2] sm:$0x1]
  %v81 = vlaneseq
  %v82 = vshrl.u32 %v81, 7
  %v83 = vsub.s32 0, %v82
  %v84 = vrot.slane %v14, %v83
  %v85 = vlaneseq
  %v86 = vshrl.u32 %v85, 7
  %v87 = vsub.s32 1, %v86
  %v88 = vrot.slane %v14, %v87
  %v89 = vlaneseq
  %v90 = vshrl.u32 %v89, 7
  %v91 = vsub.s32 2, %v90
  %v92 = vrot.slane %v14, %v91
  %v93 = vlaneseq
  %v94 = vshrl.u32 %v93, 7
  %v95 = vsub.s32 3, %v94
  %v96 = vrot.slane %v14, %v95
  %101 = vmatprep.subr.mxu0 0.0
  %102 = vmatpush1.msra.mxu0 %v15
  %103 = vmatprep.subr.mxu0 0.0
  %104 = vmatpush1.msra.mxu0 %v16
  %105 = vmatprep.subr.mxu0 0.0
  %106 = vmatpush1.msra.mxu0 %v17
  %107 = vmatprep.subr.mxu0 0.0
  %108 = vmatpush1.msra.mxu0 %v18
  %109 = vmatprep.subr.mxu0 0.0
  %110 = vmatpush1.msra.mxu0 %v19
  %111 = vmatprep.subr.mxu0 0.0
  %112 = vmatpush1.msra.mxu0 %v20
  %113 = vmatprep.subr.mxu0 0.0
  %114 = vmatpush1.msra.mxu0 %v21
  %115 = vmatprep.subr.mxu0 0.0
  %116 = vmatpush1.msra.mxu0 %v22
  %117 = vmatprep.subr.mxu0 0.0
  %118 = vmatpush1.msra.mxu0 %v23
  %119 = vmatprep.subr.mxu0 0.0
  %120 = vmatpush1.msra.mxu0 %v24
  %121 = vmatprep.subr.mxu0 0.0
  %122 = vmatpush1.msra.mxu0 %v25
  %123 = vmatprep.subr.mxu0 0.0
  %124 = vmatpush1.msra.mxu0 %v26
  %125 = vmatprep.subr.mxu0 0.0
  %126 = vmatpush1.msra.mxu0 %v27
  %127 = vmatprep.subr.mxu0 0.0
  %128 = vmatpush1.msra.mxu0 %v28
  %129 = vmatprep.subr.mxu0 0.0
  %130 = vmatpush1.msra.mxu0 %v29
  %131 = vmatprep.subr.mxu0 0.0
  %132 = vmatpush1.msra.mxu0 %v30
  %133 = vmatprep.subr.mxu0 0.0
  %134 = vmatpush1.msra.mxu0 %v31
  %135 = vmatprep.subr.mxu0 0.0
  %136 = vmatpush1.msra.mxu0 %v32
  %137 = vmatprep.subr.mxu0 0.0
  %138 = vmatpush1.msra.mxu0 %v33
  %139 = vmatprep.subr.mxu0 0.0
  %140 = vmatpush1.msra.mxu0 %v34
  %141 = vmatprep.subr.mxu0 0.0
  %142 = vmatpush1.msra.mxu0 %v35
  %143 = vmatprep.subr.mxu0 0.0
  %144 = vmatpush1.msra.mxu0 %v36
  %145 = vmatprep.subr.mxu0 0.0
  %146 = vmatpush1.msra.mxu0 %v37
  %147 = vmatprep.subr.mxu0 0.0
  %148 = vmatpush1.msra.mxu0 %v38
  %149 = vmatprep.subr.mxu0 0.0
  %150 = vmatpush1.msra.mxu0 %v39
  %151 = vmatprep.subr.mxu0 0.0
  %152 = vmatpush1.msra.mxu0 %v40
  %153 = vmatprep.subr.mxu0 0.0
  %154 = vmatpush1.msra.mxu0 %v41
  %155 = vmatprep.subr.mxu0 0.0
  %156 = vmatpush1.msra.mxu0 %v42
  %157 = vmatprep.subr.mxu0 0.0
  %158 = vmatpush1.msra.mxu0 %v43
  %159 = vmatprep.subr.mxu0 0.0
  %160 = vmatpush1.msra.mxu0 %v44
  %161 = vmatprep.subr.mxu0 0.0
  %162 = vmatpush1.msra.mxu0 %v45
  %163 = vmatprep.subr.mxu0 0.0
  %164 = vmatpush1.msra.mxu0 %v46
  %165 = vmatprep.mubr.f32.mxu0 %v88
  %166 = vmatmul.mubr.f32.gmra.mrb[0].mxu0 %v84
  %v167 = vpop.f32.mrb[0].mxu0
  %v168 = vadd.f32 %v79, %v167
  %v169 = vpop.f32.mrb[0].mxu0
  %170 = vdwg.mxu0
  %171 = vmatprep.subr.mxu0 0.0
  %172 = vmatpush1.msra.mxu0 %v47
  %173 = vmatprep.subr.mxu0 0.0
  %174 = vmatpush1.msra.mxu0 %v48
  %175 = vmatprep.subr.mxu0 0.0
  %176 = vmatpush1.msra.mxu0 %v49
  %177 = vmatprep.subr.mxu0 0.0
  %178 = vmatpush1.msra.mxu0 %v50
  %179 = vmatprep.subr.mxu0 0.0
  %180 = vmatpush1.msra.mxu0 %v51
  %181 = vmatprep.subr.mxu0 0.0
  %182 = vmatpush1.msra.mxu0 %v52
  %183 = vmatprep.subr.mxu0 0.0
  %184 = vmatpush1.msra.mxu0 %v53
  %185 = vmatprep.subr.mxu0 0.0
  %186 = vmatpush1.msra.mxu0 %v54
  %187 = vmatprep.subr.mxu0 0.0
  %188 = vmatpush1.msra.mxu0 %v55
  %189 = vmatprep.subr.mxu0 0.0
  %190 = vmatpush1.msra.mxu0 %v56
  %191 = vmatprep.subr.mxu0 0.0
  %192 = vmatpush1.msra.mxu0 %v57
  %193 = vmatprep.subr.mxu0 0.0
  %194 = vmatpush1.msra.mxu0 %v58
  %195 = vmatprep.subr.mxu0 0.0
  %196 = vmatpush1.msra.mxu0 %v59
  %197 = vmatprep.subr.mxu0 0.0
  %198 = vmatpush1.msra.mxu0 %v60
  %199 = vmatprep.subr.mxu0 0.0
  %200 = vmatpush1.msra.mxu0 %v61
  %201 = vmatprep.subr.mxu0 0.0
  %202 = vmatpush1.msra.mxu0 %v62
  %203 = vmatprep.subr.mxu0 0.0
  %204 = vmatpush1.msra.mxu0 %v63
  %205 = vmatprep.subr.mxu0 0.0
  %206 = vmatpush1.msra.mxu0 %v64
  %207 = vmatprep.subr.mxu0 0.0
  %208 = vmatpush1.msra.mxu0 %v65
  %209 = vmatprep.subr.mxu0 0.0
  %210 = vmatpush1.msra.mxu0 %v66
  %211 = vmatprep.subr.mxu0 0.0
  %212 = vmatpush1.msra.mxu0 %v67
  %213 = vmatprep.subr.mxu0 0.0
  %214 = vmatpush1.msra.mxu0 %v68
  %215 = vmatprep.subr.mxu0 0.0
  %216 = vmatpush1.msra.mxu0 %v69
  %217 = vmatprep.subr.mxu0 0.0
  %218 = vmatpush1.msra.mxu0 %v70
  %219 = vmatprep.subr.mxu0 0.0
  %220 = vmatpush1.msra.mxu0 %v71
  %221 = vmatprep.subr.mxu0 0.0
  %222 = vmatpush1.msra.mxu0 %v72
  %223 = vmatprep.subr.mxu0 0.0
  %224 = vmatpush1.msra.mxu0 %v73
  %225 = vmatprep.subr.mxu0 0.0
  %226 = vmatpush1.msra.mxu0 %v74
  %227 = vmatprep.subr.mxu0 0.0
  %228 = vmatpush1.msra.mxu0 %v75
  %229 = vmatprep.subr.mxu0 0.0
  %230 = vmatpush1.msra.mxu0 %v76
  %231 = vmatprep.subr.mxu0 0.0
  %232 = vmatpush1.msra.mxu0 %v77
  %233 = vmatprep.subr.mxu0 0.0
  %234 = vmatpush1.msra.mxu0 %v78
  %235 = vmatprep.mubr.f32.mxu0 %v96
  %236 = vmatmul.mubr.f32.gmra.mrb[0].mxu0 %v92
  %v237 = vpop.f32.mrb[0].mxu0
  %v238 = vadd.f32 %v168, %v237
  %v239 = vpop.f32.mrb[0].mxu0
  %240 = vdwg.mxu0
  %v241 = vmul.f32 %v238, 1.442695
  %v242 = vpow.pop %v241
  %v243 = vadd.f32 %v242, 1.0
  %v244 = vrcp.pop %v243
  %v245 = vmul.f32 1.0, %v244
  %vm246 = vcmask 253952
  %247 = vst.msk [vmem:[%s3] sm:$0x1] %vm246, %v245
  // Predicated region
  $region14: #{fake_news_classifier_forward.1} parent=0 // pred_check
    _
  $region15: #{fake_news_classifier_forward.1} parent=0 // pred_check_branch
    %249 = sbr.rel (0) target = $region17
  $region16: #{fake_news_classifier_forward.1} parent=0 // pred_region
    _
  $region17: #{fake_news_classifier_forward.1} parent=0 // pred_fallthru
    _
  // Predicated region
  $region18: #{fake_news_classifier_forward.1} parent=0 // pred_check
    _
  $region19: #{fake_news_classifier_forward.1} parent=0 // pred_check_branch
    %251 = sbr.rel (0) target = $region21
  $region20: #{fake_news_classifier_forward.1} parent=0 // pred_region
    _
  $region21: #{fake_news_classifier_forward.1} parent=0 // pred_fallthru
    _

</llo_original>
